<compile_context>
chip_gen: v5e
topology: v5e:2x2
jax: 0.10.0
libtpu: 0.0.40
codegen_flags: <defaults>
</compile_context>

<pallas_src>
import functools

import jax
import jax.numpy as jnp
from jax.experimental import pallas as pl
from jax.experimental.pallas import tpu as pltpu


def _smooth_sigmoid_kernel(x_ref, o_ref, *, half_k):
    # sigmoid(k*x) = 0.5 * (1 + tanh(0.5*k*x)): a single EUP transcendental
    # plus ~3 VALU ops per vreg -- far below the HBM delivery rate, so the
    # body is not the bottleneck on any TPU generation.
    x = x_ref[...].astype(jnp.float32)
    y = 0.5 * (1.0 + jnp.tanh(half_k * x))
    o_ref[...] = y.astype(o_ref.dtype)


# dtype itemsize -> native sublane multiple for the (sublane, 128) tile.
_SUBLANE_MULTIPLE = {4: 8, 2: 16, 1: 32}


def smooth_sigmoid(x, slope=1.0, *, lane_width=1024, target_block_bytes=4 << 20):
    """Elementwise 1/(1+exp(-slope*x)); matches torch SmoothSigmoid (same shape/dtype)."""
    orig_shape = x.shape
    n = x.size
    W = lane_width  # multiple of 128 -> lane-dense, unmasked vst
    half_k = 0.5 * float(slope)

    x_flat = x.reshape(-1)
    n_main = (n // W) * W          # W-divisible prefix handled by the kernel
    rows = n_main // W
    tail = n - n_main              # < W elements, handled with plain jnp

    parts = []

    if rows > 0:
        x2d = x_flat[:n_main].reshape(rows, W)
        sub = _SUBLANE_MULTIPLE.get(x2d.dtype.itemsize, 8)
        bytes_per_row = W * x2d.dtype.itemsize

        # Largest row-tile keeping one block ~target_block_bytes.
        block_rows = min(rows, max(sub, int(target_block_bytes // bytes_per_row)))
        if block_rows < rows:
            # Keep the sublane dim a native-tile multiple; a partial last
            # block (rows % block_rows != 0) is masked by Pallas.
            block_rows = max(sub, (block_rows // sub) * sub)
        grid = (pl.cdiv(rows, block_rows),)

        out2d = pl.pallas_call(
            functools.partial(_smooth_sigmoid_kernel, half_k=half_k),
            out_shape=jax.ShapeDtypeStruct((rows, W), x2d.dtype),
            grid=grid,
            in_specs=[pl.BlockSpec((block_rows, W), lambda i: (i, 0))],
            out_specs=pl.BlockSpec((block_rows, W), lambda i: (i, 0)),
            compiler_params=pltpu.CompilerParams(
                dimension_semantics=("parallel",),
                vmem_limit_bytes=48 << 20,
            ),
        )(x2d)
        parts.append(out2d.reshape(-1))

    if tail:
        xt = x_flat[n_main:].astype(jnp.float32)
        yt = (0.5 * (1.0 + jnp.tanh(half_k * xt))).astype(x.dtype)
        parts.append(yt)

    out_flat = parts[0] if len(parts) == 1 else jnp.concatenate(parts)
    return out_flat.reshape(orig_shape)


if __name__ == "__main__":
    key = jax.random.PRNGKey(0)
    # NCHW input consistent with the PINN usage: batch=2, channels=4, 16x16.
    x = jax.random.normal(key, (2, 4, 16, 16), dtype=jnp.float32)

    slope = 1.0
    y = jax.block_until_ready(smooth_sigmoid(x, slope=slope))

    # Reference check (pure JAX, exp form) to validate semantics.
    y_ref = 1.0 / (1.0 + jnp.exp(-slope * x))
    assert y.shape == x.shape and y.dtype == x.dtype
    err = jnp.max(jnp.abs(y - y_ref))
    assert err < 1e-5, err  # tanh-form vs exp-form differ only at the ULP level

    # Also exercise the non-divisible (tail) path once.
    x_odd = jax.random.normal(jax.random.PRNGKey(1), (3, 5, 7), dtype=jnp.float32)
    y_odd = jax.block_until_ready(smooth_sigmoid(x_odd, slope=2.5))
    y_odd_ref = 1.0 / (1.0 + jnp.exp(-2.5 * x_odd))
    assert y_odd.shape == x_odd.shape
    assert jnp.max(jnp.abs(y_odd - y_odd_ref)) < 1e-5

    print("KERNEL_OK")
</pallas_src>

<mosaic_0001>
module attributes {stable_mosaic.version = 11 : i64} {
  func.func @_smooth_sigmoid_kernel(%arg0: i32, %arg1: memref<2x1024xf32, #tpu.memory_space<vmem>>, %arg2: memref<2x1024xf32, #tpu.memory_space<vmem>>) attributes {dimension_semantics = [#tpu.dimension_semantics<parallel>], iteration_bounds = array<i64: 1>, scalar_prefetch = 0 : i64, scratch_operands = 0 : i64, tpu.core_type = #tpu.core_type<tc>, window_params = [{transform_indices = @transform_0, window_bounds = array<i64: 2, 1024>}, {transform_indices = @transform_1, window_bounds = array<i64: 2, 1024>}]} {
    %c0 = arith.constant 0 : index
    %c0_0 = arith.constant 0 : index
    %0 = vector.load %arg1[%c0, %c0_0] : memref<2x1024xf32, #tpu.memory_space<vmem>>, vector<2x1024xf32>
    %cst = arith.constant 5.000000e-01 : f32
    %1 = vector.broadcast %cst : f32 to vector<2x1024xf32>
    %2 = arith.mulf %1, %0 : vector<2x1024xf32>
    %3 = math.tanh %2 : vector<2x1024xf32>
    %cst_1 = arith.constant 1.000000e+00 : f32
    %4 = vector.broadcast %cst_1 : f32 to vector<2x1024xf32>
    %5 = arith.addf %4, %3 : vector<2x1024xf32>
    %cst_2 = arith.constant 5.000000e-01 : f32
    %6 = vector.broadcast %cst_2 : f32 to vector<2x1024xf32>
    %7 = arith.mulf %6, %5 : vector<2x1024xf32>
    %c0_3 = arith.constant 0 : index
    %c0_4 = arith.constant 0 : index
    %8 = vector.load %arg2[%c0_3, %c0_4] : memref<2x1024xf32, #tpu.memory_space<vmem>>, vector<2x1024xf32>
    tpu.vector_store %arg2[%c0_3, %c0_4], %7 {strides = array<i32>} : memref<2x1024xf32, #tpu.memory_space<vmem>>, vector<2x1024xf32>,
    return
  }
  func.func @transform_0(%arg0: i32) -> (i32, i32) {
    %c0_i32 = arith.constant 0 : i32
    %c0_i32_0 = arith.constant 0 : i32
    return %arg0, %c0_i32 : i32, i32
  }
  func.func @transform_1(%arg0: i32) -> (i32, i32) {
    %c0_i32 = arith.constant 0 : i32
    %c0_i32_0 = arith.constant 0 : i32
    return %arg0, %c0_i32 : i32, i32
  }
}

</mosaic_0001>

<llo_original>
// kernel: tpu_custom_call.1
$region0: #{tpu_custom_call.1}
  #allocation0 [shape = 'u32[]', space=smem, size = 0x4, offset = 0x4, fixed_abs, tag = 'smem constant byte address 0x4 - core index']
  #allocation1 [shape = 'u32[72,128]{1,0:T(1,128)}', space=vmem, size = 0x9000, scoped, tag = 'internal scratch']
  %s0 = inlined_call_operand.hbm [shape: f32[2,1024], index: 0, kind: input, shape index: {}]
  %s1 = inlined_call_operand.hbm [shape: f32[2,1024], index: 1, kind: output, shape index: {}]
  %s2 = sld [smem:[#allocation0]]
  $region18: #{tpu_custom_call.1} parent=0
    _
  %s4 = ssub.s32 1, %s2
  %s5 = scalar_select 0, %s4, %s2
  $region1: #{tpu_custom_call.1} parent=0
    #allocation2 [shape = 'u8[8192]{0}', space=vmem, size = 0x2000, scoped, tag = 'input window, operand 0, single buffered']
    #allocation3 [shape = 's32[1]{0}', space=sflag, size = 0x4, scoped, tag = 'scoped memory for tpu_custom_call.1']
    #allocation4 [shape = 's32[1]{0}', space=sflag, size = 0x4, scoped, tag = 'scoped memory for tpu_custom_call.1']
    #allocation5 [shape = 'u8[8192]{0}', space=vmem, size = 0x2000, scoped, tag = 'output window, operand 0, single buffered']
    %6 = vsyncpa [#allocation3], 0
    %7 = vsyncpa [#allocation4], 0
    // Predicated region
    $region2: #{tpu_custom_call.1} parent=1 // pred_check
      _
    $region3: #{tpu_custom_call.1} parent=1 // pred_check_branch
      %9 = sbr.rel (0) target = $region5
    $region4: #{tpu_custom_call.1} parent=1 // pred_region
      %11 = vsyncadd [#allocation3], 0
      %s13 = sshll.u32 %s0, 4
      %s14 = int_to_ptr.hbm [resolvable:$true] %s13
      %s15 = sshll.u32 [#allocation2], 4
      %s16 = int_to_ptr.vmem [resolvable:$true] %s15
      %18 = dma.hbm_to_vmem [thread:$0]  %s14, 256, %s16, [#allocation3]
    $region5: #{tpu_custom_call.1} parent=1 // pred_fallthru
      _
    // Predicated region
    $region6: #{tpu_custom_call.1} parent=1 // pred_check
      _
    $region7: #{tpu_custom_call.1} parent=1 // pred_check_branch
      %20 = sbr.rel (0) target = $region9
    $region8: #{tpu_custom_call.1} parent=1 // pred_region
      %22 = dma.done [#allocation3], 256
    $region9: #{tpu_custom_call.1} parent=1 // pred_fallthru
      _
    %v23 = vld [vmem:[#allocation2] sm:$0xff]
    %v24 = vld [vmem:[#allocation2 + $0x8] sm:$0xff]
    %v25 = vmul.f32 %v23, 0.5
    %v26 = vmul.f32 %v24, 0.5
    %v27 = vtanh.pop %v25
    %v28 = vtanh.pop %v26
    %v29 = vadd.f32 %v27, 1.0
    %v30 = vadd.f32 %v28, 1.0
    %v31 = vmul.f32 %v29, 0.5
    %v32 = vmul.f32 %v30, 0.5
    %33 = vst [vmem:[#allocation5] sm:$0xff] %v31
    %34 = vst [vmem:[#allocation5 + $0x8] sm:$0xff] %v32
    // Predicated region
    $region10: #{tpu_custom_call.1} parent=1 // pred_check
      _
    $region11: #{tpu_custom_call.1} parent=1 // pred_check_branch
      %36 = sbr.rel (0) target = $region13
    $region12: #{tpu_custom_call.1} parent=1 // pred_region
      %38 = vsyncadd [#allocation4], 0
      %s40 = sshll.u32 [#allocation5], 4
      %s41 = int_to_ptr.vmem [resolvable:$true] %s40
      %s42 = sshll.u32 %s1, 4
      %s43 = int_to_ptr.hbm [resolvable:$true] %s42
      %45 = dma.vmem_to_hbm [thread:$0]  %s41, 256, %s43, [#allocation4]
    $region13: #{tpu_custom_call.1} parent=1 // pred_fallthru
      _
    // Predicated region
    $region14: #{tpu_custom_call.1} parent=1 // pred_check
      _
    $region15: #{tpu_custom_call.1} parent=1 // pred_check_branch
      %47 = sbr.rel (0) target = $region17
    $region16: #{tpu_custom_call.1} parent=1 // pred_region
      %49 = dma.done [#allocation4], 256
    $region17: #{tpu_custom_call.1} parent=1 // pred_fallthru
      _
    %50 = vsyncpa [#allocation3], 1
    %51 = vsyncpa [#allocation4], 1

</llo_original>
